<compile_context>
chip_gen: v5e
topology: v5e:2x2
jax: 0.10.0
libtpu: 0.0.40
codegen_flags: <defaults>
</compile_context>

<pallas_src>
import functools

import jax
import jax.numpy as jnp
from jax.experimental import pallas as pl
from jax.experimental.pallas import tpu as pltpu

LANE = 128      # pad feature dims to 128 lanes for clean TPU layouts
SUBLANE = 8
TB_MAX = 512    # batch-tile rows per grid step


def _round_up(n, m):
    return ((n + m - 1) // m) * m


def _cnn_kernel(x_ref, wconv_ref, bconv_ref, w1_ref, b1_ref, w2_ref, b2_ref,
                out_ref):
    """Fused conv(folded im2col) + ReLU + maxpool(lane rolls) + fc1 + ReLU + fc2."""
    # Conv for all 4 output positions in one matmul: (TB,128) @ (128,128).
    # Output lane layout: lane = pos*16 + channel, pos in {0..3}; lanes >=64 = 0.
    conv = jnp.dot(x_ref[...], wconv_ref[...],
                   preferred_element_type=jnp.float32)
    conv = jnp.maximum(conv + bconv_ref[...], 0.0)          # bias + ReLU (>= 0)

    # MaxPool2d(2,2) over the four 16-lane position groups, same channel.
    # Use both roll directions (positive shifts 32/96 and 16/112); since all
    # values are >= 0 and lanes >= 64 are exactly 0, the extra operands are
    # either the correct same-channel lanes or harmless zeros.
    m1 = jnp.maximum(conv,
                     jnp.maximum(pltpu.roll(conv, 32, 1),
                                 pltpu.roll(conv, 96, 1)))
    pooled = jnp.maximum(m1,
                         jnp.maximum(pltpu.roll(m1, 16, 1),
                                     pltpu.roll(m1, 112, 1)))
    # lanes 0..15 of `pooled` hold the pooled conv channels; lanes >= 16 are
    # don't-care because w1 rows >= 16 are zero.

    # fc1: (TB,128) @ (128,128) + b1, ReLU
    h = jnp.dot(pooled, w1_ref[...], preferred_element_type=jnp.float32)
    h = jnp.maximum(h + b1_ref[...], 0.0)

    # fc2: (TB,128) @ (128,128) + b2 (only first num_classes lanes are real)
    out = jnp.dot(h, w2_ref[...], preferred_element_type=jnp.float32)
    out_ref[...] = out + b2_ref[...]


def prepare_params(params, input_channels, num_classes):
    """One-time weight prep: fold im2col into the conv matrix, pad to 128 lanes."""
    w_conv, b_conv, w_fc1, b_fc1, w_fc2, b_fc2 = params
    C = input_channels
    assert 4 * C <= LANE and num_classes <= LANE

    # Folded conv matrix W_all: (C*4, 64).
    #   row  index = c*4 + h*2 + w          (input pixel, NCHW flatten order)
    #   lane index = (oh*2 + ow)*16 + o     (output position, output channel)
    # W_all[c*4+h*2+w, pos*16+o] = w_conv[o, c, h-oh+1, w-ow+1]; 'SAME' padding
    # contributions are zero and simply never appear.
    rows = []
    for h in range(2):
        for w in range(2):
            cols = []
            for oh in range(2):
                for ow in range(2):
                    cols.append(w_conv[:, :, h - oh + 1, w - ow + 1].T)  # (C,16)
            rows.append(jnp.stack(cols, axis=0))                         # (4,C,16)
    w4 = jnp.stack(rows, axis=0)                          # (ipos, opos, C, 16)
    w_all = jnp.transpose(w4, (2, 0, 1, 3)).reshape(C * 4, 64)

    wconv_p = jnp.zeros((LANE, LANE), jnp.float32).at[:C * 4, :64].set(w_all)
    bconv_p = jnp.zeros((1, LANE), jnp.float32).at[0, :64].set(
        jnp.tile(b_conv, 4))

    w1_p = jnp.zeros((LANE, LANE), jnp.float32).at[:16, :128].set(w_fc1.T)
    b1_p = jnp.zeros((1, LANE), jnp.float32).at[0, :128].set(b_fc1)
    w2_p = jnp.zeros((LANE, LANE), jnp.float32).at[:128, :num_classes].set(
        w_fc2.T)
    b2_p = jnp.zeros((1, LANE), jnp.float32).at[0, :num_classes].set(b_fc2)
    return (wconv_p, bconv_p, w1_p, b1_p, w2_p, b2_p)


@functools.partial(jax.jit, static_argnums=(2,))
def cnn_forward(x, prepared, num_classes):
    """Run the CNNModel forward pass. x: (B, C, 2, 2) float32, NCHW."""
    wconv_p, bconv_p, w1_p, b1_p, w2_p, b2_p = prepared
    B, C, H, W = x.shape
    assert (H, W) == (2, 2), "fc head (16*1*1) implies 2x2 spatial input"

    # Pad batch rows to a sublane-aligned tile count.
    B_pad = _round_up(max(B, 1), SUBLANE)
    TB = min(TB_MAX, B_pad)
    B_pad = _round_up(B_pad, TB)

    # Only per-call glue: flatten + pad the activation (no im2col replication).
    x_flat = x.reshape(B, C * 4).astype(jnp.float32)
    x_p = jnp.zeros((B_pad, LANE), jnp.float32).at[:B, :C * 4].set(x_flat)

    grid = (B_pad // TB,)
    flops = 3 * 2 * B_pad * LANE * LANE
    bytes_accessed = (2 * B_pad * LANE + 3 * LANE * LANE + 3 * LANE) * 4

    out = pl.pallas_call(
        _cnn_kernel,
        out_shape=jax.ShapeDtypeStruct((B_pad, LANE), jnp.float32),
        grid=grid,
        in_specs=[
            pl.BlockSpec((TB, LANE), lambda i: (i, 0)),      # activations (tiled)
            pl.BlockSpec((LANE, LANE), lambda i: (0, 0)),    # folded conv weight
            pl.BlockSpec((1, LANE), lambda i: (0, 0)),       # conv bias (x4 tiled)
            pl.BlockSpec((LANE, LANE), lambda i: (0, 0)),    # fc1 weight
            pl.BlockSpec((1, LANE), lambda i: (0, 0)),       # fc1 bias
            pl.BlockSpec((LANE, LANE), lambda i: (0, 0)),    # fc2 weight
            pl.BlockSpec((1, LANE), lambda i: (0, 0)),       # fc2 bias
        ],
        out_specs=pl.BlockSpec((TB, LANE), lambda i: (i, 0)),
        compiler_params=pltpu.CompilerParams(
            dimension_semantics=("parallel",)),
        cost_estimate=pl.CostEstimate(
            flops=flops, transcendentals=0, bytes_accessed=bytes_accessed),
    )(x_p, wconv_p, bconv_p, w1_p, b1_p, w2_p, b2_p)

    return out[:B, :num_classes]


def reference_forward(x, params):
    """Pure-JAX reference matching the PyTorch module semantics."""
    w_conv, b_conv, w_fc1, b_fc1, w_fc2, b_fc2 = params
    conv = jax.lax.conv_general_dilated(
        x, w_conv, window_strides=(1, 1), padding="SAME",
        dimension_numbers=("NCHW", "OIHW", "NCHW"))
    conv = jnp.maximum(conv + b_conv[None, :, None, None], 0.0)
    pooled = jnp.max(conv, axis=(2, 3))             # maxpool 2x2 on 2x2 -> 1x1
    h = jnp.maximum(pooled @ w_fc1.T + b_fc1, 0.0)
    return h @ w_fc2.T + b_fc2


def init_params(key, input_channels, num_classes):
    ks = jax.random.split(key, 6)
    w_conv = jax.random.normal(ks[0], (16, input_channels, 3, 3),
                               jnp.float32) * 0.1
    b_conv = jax.random.normal(ks[1], (16,), jnp.float32) * 0.1
    w_fc1 = jax.random.normal(ks[2], (128, 16), jnp.float32) * 0.1
    b_fc1 = jax.random.normal(ks[3], (128,), jnp.float32) * 0.1
    w_fc2 = jax.random.normal(ks[4], (num_classes, 128), jnp.float32) * 0.1
    b_fc2 = jax.random.normal(ks[5], (num_classes,), jnp.float32) * 0.1
    return (w_conv, b_conv, w_fc1, b_fc1, w_fc2, b_fc2)


if __name__ == "__main__":
    B, C, NUM_CLASSES = 2, 4, 3
    key = jax.random.PRNGKey(0)
    k_x, k_p = jax.random.split(key)
    x = jax.random.normal(k_x, (B, C, 2, 2), jnp.float32)
    params = init_params(k_p, C, NUM_CLASSES)

    prepared = prepare_params(params, C, NUM_CLASSES)   # one-time weight prep
    out = cnn_forward(x, prepared, NUM_CLASSES)
    out = jax.block_until_ready(out)

    ref = jax.block_until_ready(reference_forward(x, params))
    assert out.shape == (B, NUM_CLASSES)
    assert jnp.allclose(out, ref, atol=1e-4, rtol=1e-4), (out, ref)
    print("KERNEL_OK")
</pallas_src>

<mosaic_0001>
module attributes {stable_mosaic.version = 11 : i64} {
  func.func @_cnn_kernel(%arg0: i32, %arg1: memref<8x128xf32, #tpu.memory_space<vmem>>, %arg2: memref<128x128xf32, #tpu.memory_space<vmem>>, %arg3: memref<1x128xf32, #tpu.memory_space<vmem>>, %arg4: memref<128x128xf32, #tpu.memory_space<vmem>>, %arg5: memref<1x128xf32, #tpu.memory_space<vmem>>, %arg6: memref<128x128xf32, #tpu.memory_space<vmem>>, %arg7: memref<1x128xf32, #tpu.memory_space<vmem>>, %arg8: memref<8x128xf32, #tpu.memory_space<vmem>>) attributes {dimension_semantics = [#tpu.dimension_semantics<parallel>], iteration_bounds = array<i64: 1>, scalar_prefetch = 0 : i64, scratch_operands = 0 : i64, tpu.core_type = #tpu.core_type<tc>, window_params = [{transform_indices = @transform_0, window_bounds = array<i64: 8, 128>}, {pipeline_mode = #tpu.pipeline_mode<synchronous>, transform_indices = @transform_1, window_bounds = array<i64: 128, 128>}, {pipeline_mode = #tpu.pipeline_mode<synchronous>, transform_indices = @transform_2, window_bounds = array<i64: 1, 128>}, {pipeline_mode = #tpu.pipeline_mode<synchronous>, transform_indices = @transform_3, window_bounds = array<i64: 128, 128>}, {pipeline_mode = #tpu.pipeline_mode<synchronous>, transform_indices = @transform_4, window_bounds = array<i64: 1, 128>}, {pipeline_mode = #tpu.pipeline_mode<synchronous>, transform_indices = @transform_5, window_bounds = array<i64: 128, 128>}, {pipeline_mode = #tpu.pipeline_mode<synchronous>, transform_indices = @transform_6, window_bounds = array<i64: 1, 128>}, {transform_indices = @transform_7, window_bounds = array<i64: 8, 128>}]} {
    %c0 = arith.constant 0 : index
    %c0_0 = arith.constant 0 : index
    %0 = vector.load %arg1[%c0, %c0_0] : memref<8x128xf32, #tpu.memory_space<vmem>>, vector<8x128xf32>
    %c0_1 = arith.constant 0 : index
    %c0_2 = arith.constant 0 : index
    %1 = vector.load %arg2[%c0_1, %c0_2] : memref<128x128xf32, #tpu.memory_space<vmem>>, vector<128x128xf32>
    %cst = arith.constant dense<0.000000e+00> : vector<8x128xf32>
    %2 = tpu.matmul %0, %1, %cst {dimension_numbers = #tpu.dot_dimension_numbers<[1], [0], [0], [1], [0, 0, 1, 1], [], []>} : vector<8x128xf32>, vector<128x128xf32>, vector<8x128xf32> -> vector<8x128xf32>
    %c0_3 = arith.constant 0 : index
    %c0_4 = arith.constant 0 : index
    %3 = vector.load %arg3[%c0_3, %c0_4] : memref<1x128xf32, #tpu.memory_space<vmem>>, vector<1x128xf32>
    %4 = vector.broadcast %3 : vector<1x128xf32> to vector<8x128xf32>
    %5 = arith.addf %2, %4 : vector<8x128xf32>
    %cst_5 = arith.constant 0.000000e+00 : f32
    %6 = vector.broadcast %cst_5 : f32 to vector<8x128xf32>
    %7 = arith.maximumf %5, %6 : vector<8x128xf32>
    %c32_i32 = arith.constant 32 : i32
    %8 = tpu.dynamic_rotate %7 by %c32_i32 dim 1 : vector<8x128xf32>, i32 -> vector<8x128xf32>
    %c96_i32 = arith.constant 96 : i32
    %9 = tpu.dynamic_rotate %7 by %c96_i32 dim 1 : vector<8x128xf32>, i32 -> vector<8x128xf32>
    %10 = arith.maximumf %8, %9 : vector<8x128xf32>
    %11 = arith.maximumf %7, %10 : vector<8x128xf32>
    %c16_i32 = arith.constant 16 : i32
    %12 = tpu.dynamic_rotate %11 by %c16_i32 dim 1 : vector<8x128xf32>, i32 -> vector<8x128xf32>
    %c112_i32 = arith.constant 112 : i32
    %13 = tpu.dynamic_rotate %11 by %c112_i32 dim 1 : vector<8x128xf32>, i32 -> vector<8x128xf32>
    %14 = arith.maximumf %12, %13 : vector<8x128xf32>
    %15 = arith.maximumf %11, %14 : vector<8x128xf32>
    %c0_6 = arith.constant 0 : index
    %c0_7 = arith.constant 0 : index
    %16 = vector.load %arg4[%c0_6, %c0_7] : memref<128x128xf32, #tpu.memory_space<vmem>>, vector<128x128xf32>
    %cst_8 = arith.constant dense<0.000000e+00> : vector<8x128xf32>
    %17 = tpu.matmul %15, %16, %cst_8 {dimension_numbers = #tpu.dot_dimension_numbers<[1], [0], [0], [1], [0, 0, 1, 1], [], []>} : vector<8x128xf32>, vector<128x128xf32>, vector<8x128xf32> -> vector<8x128xf32>
    %c0_9 = arith.constant 0 : index
    %c0_10 = arith.constant 0 : index
    %18 = vector.load %arg5[%c0_9, %c0_10] : memref<1x128xf32, #tpu.memory_space<vmem>>, vector<1x128xf32>
    %19 = vector.broadcast %18 : vector<1x128xf32> to vector<8x128xf32>
    %20 = arith.addf %17, %19 : vector<8x128xf32>
    %cst_11 = arith.constant 0.000000e+00 : f32
    %21 = vector.broadcast %cst_11 : f32 to vector<8x128xf32>
    %22 = arith.maximumf %20, %21 : vector<8x128xf32>
    %c0_12 = arith.constant 0 : index
    %c0_13 = arith.constant 0 : index
    %23 = vector.load %arg6[%c0_12, %c0_13] : memref<128x128xf32, #tpu.memory_space<vmem>>, vector<128x128xf32>
    %cst_14 = arith.constant dense<0.000000e+00> : vector<8x128xf32>
    %24 = tpu.matmul %22, %23, %cst_14 {dimension_numbers = #tpu.dot_dimension_numbers<[1], [0], [0], [1], [0, 0, 1, 1], [], []>} : vector<8x128xf32>, vector<128x128xf32>, vector<8x128xf32> -> vector<8x128xf32>
    %c0_15 = arith.constant 0 : index
    %c0_16 = arith.constant 0 : index
    %25 = vector.load %arg7[%c0_15, %c0_16] : memref<1x128xf32, #tpu.memory_space<vmem>>, vector<1x128xf32>
    %26 = vector.broadcast %25 : vector<1x128xf32> to vector<8x128xf32>
    %27 = arith.addf %24, %26 : vector<8x128xf32>
    %c0_17 = arith.constant 0 : index
    %c0_18 = arith.constant 0 : index
    %28 = vector.load %arg8[%c0_17, %c0_18] : memref<8x128xf32, #tpu.memory_space<vmem>>, vector<8x128xf32>
    tpu.vector_store %arg8[%c0_17, %c0_18], %27 {strides = array<i32>} : memref<8x128xf32, #tpu.memory_space<vmem>>, vector<8x128xf32>,
    return
  }
  func.func @transform_0(%arg0: i32) -> (i32, i32) {
    %c0_i32 = arith.constant 0 : i32
    %c0_i32_0 = arith.constant 0 : i32
    return %arg0, %c0_i32 : i32, i32
  }
  func.func @transform_1(%arg0: i32) -> (i32, i32) {
    %c0_i32 = arith.constant 0 : i32
    %c0_i32_0 = arith.constant 0 : i32
    %c0_i32_1 = arith.constant 0 : i32
    return %c0_i32, %c0_i32_0 : i32, i32
  }
  func.func @transform_2(%arg0: i32) -> (i32, i32) {
    %c0_i32 = arith.constant 0 : i32
    %c0_i32_0 = arith.constant 0 : i32
    %c0_i32_1 = arith.constant 0 : i32
    return %c0_i32, %c0_i32_0 : i32, i32
  }
  func.func @transform_3(%arg0: i32) -> (i32, i32) {
    %c0_i32 = arith.constant 0 : i32
    %c0_i32_0 = arith.constant 0 : i32
    %c0_i32_1 = arith.constant 0 : i32
    return %c0_i32, %c0_i32_0 : i32, i32
  }
  func.func @transform_4(%arg0: i32) -> (i32, i32) {
    %c0_i32 = arith.constant 0 : i32
    %c0_i32_0 = arith.constant 0 : i32
    %c0_i32_1 = arith.constant 0 : i32
    return %c0_i32, %c0_i32_0 : i32, i32
  }
  func.func @transform_5(%arg0: i32) -> (i32, i32) {
    %c0_i32 = arith.constant 0 : i32
    %c0_i32_0 = arith.constant 0 : i32
    %c0_i32_1 = arith.constant 0 : i32
    return %c0_i32, %c0_i32_0 : i32, i32
  }
  func.func @transform_6(%arg0: i32) -> (i32, i32) {
    %c0_i32 = arith.constant 0 : i32
    %c0_i32_0 = arith.constant 0 : i32
    %c0_i32_1 = arith.constant 0 : i32
    return %c0_i32, %c0_i32_0 : i32, i32
  }
  func.func @transform_7(%arg0: i32) -> (i32, i32) {
    %c0_i32 = arith.constant 0 : i32
    %c0_i32_0 = arith.constant 0 : i32
    return %arg0, %c0_i32 : i32, i32
  }
}

</mosaic_0001>

<llo_original>
// kernel: cnn_forward.1
$region0: #{cnn_forward.1}
  #allocation0 [shape = 'u32[]', space=smem, size = 0x4, offset = 0x4, fixed_abs, tag = 'smem constant byte address 0x4 - core index']
  #allocation1 [shape = 'u32[72,128]{1,0:T(1,128)}', space=vmem, size = 0x9000, scoped, tag = 'internal scratch']
  %s0 = inlined_call_operand.vmem [shape: f32[8,128], index: 0, kind: input, shape index: {}]
  %s1 = inlined_call_operand.hbm [shape: f32[128,128], index: 1, kind: input, shape index: {}]
  %s2 = inlined_call_operand.vmem [shape: f32[1,128], index: 2, kind: input, shape index: {}]
  %s3 = inlined_call_operand.hbm [shape: f32[128,128], index: 3, kind: input, shape index: {}]
  %s4 = inlined_call_operand.vmem [shape: f32[1,128], index: 4, kind: input, shape index: {}]
  %s5 = inlined_call_operand.hbm [shape: f32[128,128], index: 5, kind: input, shape index: {}]
  %s6 = inlined_call_operand.vmem [shape: f32[1,128], index: 6, kind: input, shape index: {}]
  %s7 = inlined_call_operand.vmem [shape: f32[8,128], index: 7, kind: output, shape index: {}]
  %s8 = sld [smem:[#allocation0]]
  $region50: #{cnn_forward.1} parent=0
    _
  %s10 = ssub.s32 1, %s8
  %s11 = scalar_select 0, %s10, %s8
  $region1: #{cnn_forward.1} parent=0
    #allocation2 [shape = 'u8[65536]{0}', space=vmem, size = 0x10000, scoped, tag = 'input window, operand 1, single buffered']
    #allocation3 [shape = 's32[1]{0}', space=sflag, size = 0x4, scoped, tag = 'scoped memory for cnn_forward.1']
    #allocation4 [shape = 'u8[65536]{0}', space=vmem, size = 0x10000, scoped, tag = 'input window, operand 3, single buffered']
    #allocation5 [shape = 's32[1]{0}', space=sflag, size = 0x4, scoped, tag = 'scoped memory for cnn_forward.1']
    #allocation6 [shape = 'u8[65536]{0}', space=vmem, size = 0x10000, scoped, tag = 'input window, operand 5, single buffered']
    %12 = vsyncpa [#allocation3], 0
    %13 = vsyncpa [#allocation5], 0
    // Predicated region
    $region2: #{cnn_forward.1} parent=1 // pred_check
      _
    $region3: #{cnn_forward.1} parent=1 // pred_check_branch
      %15 = sbr.rel (0) target = $region5
    $region4: #{cnn_forward.1} parent=1 // pred_region
      _
    $region5: #{cnn_forward.1} parent=1 // pred_fallthru
      _
    // Predicated region
    $region6: #{cnn_forward.1} parent=1 // pred_check
      _
    $region7: #{cnn_forward.1} parent=1 // pred_check_branch
      %17 = sbr.rel (0) target = $region9
    $region8: #{cnn_forward.1} parent=1 // pred_region
      %19 = vsyncadd [#allocation3], 0
      %s20 = sshll.u32 %s1, 4
      %s21 = int_to_ptr.hbm [resolvable:$true] %s20
      %s22 = sshll.u32 [#allocation2], 4
      %s23 = int_to_ptr.vmem [resolvable:$true] %s22
      %28 = dma.hbm_to_vmem [thread:$0]  %s21, 2048, %s23, [#allocation3], 128, 128, 8
    $region9: #{cnn_forward.1} parent=1 // pred_fallthru
      _
    // Predicated region
    $region10: #{cnn_forward.1} parent=1 // pred_check
      _
    $region11: #{cnn_forward.1} parent=1 // pred_check_branch
      %30 = sbr.rel (0) target = $region13
    $region12: #{cnn_forward.1} parent=1 // pred_region
      _
    $region13: #{cnn_forward.1} parent=1 // pred_fallthru
      _
    // Predicated region
    $region14: #{cnn_forward.1} parent=1 // pred_check
      _
    $region15: #{cnn_forward.1} parent=1 // pred_check_branch
      %32 = sbr.rel (0) target = $region17
    $region16: #{cnn_forward.1} parent=1 // pred_region
      %34 = vsyncadd [#allocation5], 0
      %s35 = sshll.u32 %s3, 4
      %s36 = int_to_ptr.hbm [resolvable:$true] %s35
      %s37 = sshll.u32 [#allocation4], 4
      %s38 = int_to_ptr.vmem [resolvable:$true] %s37
      %43 = dma.hbm_to_vmem [thread:$0]  %s36, 2048, %s38, [#allocation5], 128, 128, 8
    $region17: #{cnn_forward.1} parent=1 // pred_fallthru
      _
    // Predicated region
    $region18: #{cnn_forward.1} parent=1 // pred_check
      _
    $region19: #{cnn_forward.1} parent=1 // pred_check_branch
      %45 = sbr.rel (0) target = $region21
    $region20: #{cnn_forward.1} parent=1 // pred_region
      _
    $region21: #{cnn_forward.1} parent=1 // pred_fallthru
      _
    // Predicated region
    $region22: #{cnn_forward.1} parent=1 // pred_check
      _
    $region23: #{cnn_forward.1} parent=1 // pred_check_branch
      %47 = sbr.rel (0) target = $region25
    $region24: #{cnn_forward.1} parent=1 // pred_region
      %49 = vsyncadd [#allocation5], 0
      %s50 = sshll.u32 %s5, 4
      %s51 = int_to_ptr.hbm [resolvable:$true] %s50
      %s52 = sshll.u32 [#allocation6], 4
      %s53 = int_to_ptr.vmem [resolvable:$true] %s52
      %58 = dma.hbm_to_vmem [thread:$0]  %s51, 2048, %s53, [#allocation5], 128, 128, 8
    $region25: #{cnn_forward.1} parent=1 // pred_fallthru
      _
    // Predicated region
    $region26: #{cnn_forward.1} parent=1 // pred_check
      _
    $region27: #{cnn_forward.1} parent=1 // pred_check_branch
      %60 = sbr.rel (0) target = $region29
    $region28: #{cnn_forward.1} parent=1 // pred_region
      _
    $region29: #{cnn_forward.1} parent=1 // pred_fallthru
      _
    // Predicated region
    $region30: #{cnn_forward.1} parent=1 // pred_check
      _
    $region31: #{cnn_forward.1} parent=1 // pred_check_branch
      %62 = sbr.rel (0) target = $region33
    $region32: #{cnn_forward.1} parent=1 // pred_region
      %64 = dma.done [#allocation3], 2048
    $region33: #{cnn_forward.1} parent=1 // pred_fallthru
      _
    // Predicated region
    $region34: #{cnn_forward.1} parent=1 // pred_check
      _
    $region35: #{cnn_forward.1} parent=1 // pred_check_branch
      %66 = sbr.rel (0) target = $region37
    $region36: #{cnn_forward.1} parent=1 // pred_region
      %68 = dma.done [#allocation5], 2048
    $region37: #{cnn_forward.1} parent=1 // pred_fallthru
      _
    // Predicated region
    $region38: #{cnn_forward.1} parent=1 // pred_check
      _
    $region39: #{cnn_forward.1} parent=1 // pred_check_branch
      %70 = sbr.rel (0) target = $region41
    $region40: #{cnn_forward.1} parent=1 // pred_region
      %72 = dma.done [#allocation5], 2048
    $region41: #{cnn_forward.1} parent=1 // pred_fallthru
      _
    %v73 = vld [vmem:[%s0] sm:$0xff]
    %v74 = vld [vmem:[#allocation2] sm:$0xff]
    %v75 = vld [vmem:[#allocation2 + $0x8] sm:$0xff]
    %v76 = vld [vmem:[#allocation2 + $0x10] sm:$0xff]
    %v77 = vld [vmem:[#allocation2 + $0x18] sm:$0xff]
    %v78 = vld [vmem:[#allocation2 + $0x20] sm:$0xff]
    %v79 = vld [vmem:[#allocation2 + $0x28] sm:$0xff]
    %v80 = vld [vmem:[#allocation2 + $0x30] sm:$0xff]
    %v81 = vld [vmem:[#allocation2 + $0x38] sm:$0xff]
    %v82 = vld [vmem:[#allocation2 + $0x40] sm:$0xff]
    %v83 = vld [vmem:[#allocation2 + $0x48] sm:$0xff]
    %v84 = vld [vmem:[#allocation2 + $0x50] sm:$0xff]
    %v85 = vld [vmem:[#allocation2 + $0x58] sm:$0xff]
    %v86 = vld [vmem:[#allocation2 + $0x60] sm:$0xff]
    %v87 = vld [vmem:[#allocation2 + $0x68] sm:$0xff]
    %v88 = vld [vmem:[#allocation2 + $0x70] sm:$0xff]
    %v89 = vld [vmem:[#allocation2 + $0x78] sm:$0xff]
    %v90 = vld [vmem:[%s2] sm:$0x1]
    %v92 = vperm.slane %v90, 0
    %94 = vmatpush.msra.mxu0 %v89
    %95 = vmatpush.msra.mxu0 %v88
    %96 = vmatpush.msra.mxu0 %v87
    %97 = vmatpush.msra.mxu0 %v86
    %98 = vmatpush.msra.mxu0 %v85
    %99 = vmatpush.msra.mxu0 %v84
    %100 = vmatpush.msra.mxu0 %v83
    %101 = vmatpush.msra.mxu0 %v82
    %102 = vmatpush.msra.mxu0 %v81
    %103 = vmatpush.msra.mxu0 %v80
    %104 = vmatpush.msra.mxu0 %v79
    %105 = vmatpush.msra.mxu0 %v78
    %106 = vmatpush.msra.mxu0 %v77
    %107 = vmatpush.msra.mxu0 %v76
    %108 = vmatpush.msra.mxu0 %v75
    %109 = vmatpush.msra.mxu0 %v74
    %110 = vmatmul.f32.gmra.mxu0 %v73
    %v111 = vpop.f32.mrf.mxu0
    %v112 = vadd.f32 %v92, %v111
    %113 = vdwg.mxu0
    %v114 = vmax.f32 %v112, 0.0
    %115 = vrot.lane.b32.xlu0 %v114, 32
    %v116 = vpop.permute.xlu0 %115
    %117 = vrot.lane.b32.xlu0 %v114, 96
    %v118 = vpop.permute.xlu0 %117
    %v119 = vmax.f32 %v116, %v118
    %v120 = vmax.f32 %v114, %v119
    %121 = vrot.lane.b32.xlu0 %v120, 16
    %v122 = vpop.permute.xlu0 %121
    %123 = vrot.lane.b32.xlu0 %v120, 112
    %v124 = vpop.permute.xlu0 %123
    %v125 = vmax.f32 %v122, %v124
    %v126 = vmax.f32 %v120, %v125
    %v127 = vld [vmem:[#allocation4] sm:$0xff]
    %v128 = vld [vmem:[#allocation4 + $0x8] sm:$0xff]
    %v129 = vld [vmem:[#allocation4 + $0x10] sm:$0xff]
    %v130 = vld [vmem:[#allocation4 + $0x18] sm:$0xff]
    %v131 = vld [vmem:[#allocation4 + $0x20] sm:$0xff]
    %v132 = vld [vmem:[#allocation4 + $0x28] sm:$0xff]
    %v133 = vld [vmem:[#allocation4 + $0x30] sm:$0xff]
    %v134 = vld [vmem:[#allocation4 + $0x38] sm:$0xff]
    %v135 = vld [vmem:[#allocation4 + $0x40] sm:$0xff]
    %v136 = vld [vmem:[#allocation4 + $0x48] sm:$0xff]
    %v137 = vld [vmem:[#allocation4 + $0x50] sm:$0xff]
    %v138 = vld [vmem:[#allocation4 + $0x58] sm:$0xff]
    %v139 = vld [vmem:[#allocation4 + $0x60] sm:$0xff]
    %v140 = vld [vmem:[#allocation4 + $0x68] sm:$0xff]
    %v141 = vld [vmem:[#allocation4 + $0x70] sm:$0xff]
    %v142 = vld [vmem:[#allocation4 + $0x78] sm:$0xff]
    %v143 = vld [vmem:[%s4] sm:$0x1]
    %v145 = vperm.slane %v143, 0
    %147 = vmatpush.msra.mxu0 %v142
    %148 = vmatpush.msra.mxu0 %v141
    %149 = vmatpush.msra.mxu0 %v140
    %150 = vmatpush.msra.mxu0 %v139
    %151 = vmatpush.msra.mxu0 %v138
    %152 = vmatpush.msra.mxu0 %v137
    %153 = vmatpush.msra.mxu0 %v136
    %154 = vmatpush.msra.mxu0 %v135
    %155 = vmatpush.msra.mxu0 %v134
    %156 = vmatpush.msra.mxu0 %v133
    %157 = vmatpush.msra.mxu0 %v132
    %158 = vmatpush.msra.mxu0 %v131
    %159 = vmatpush.msra.mxu0 %v130
    %160 = vmatpush.msra.mxu0 %v129
    %161 = vmatpush.msra.mxu0 %v128
    %162 = vmatpush.msra.mxu0 %v127
    %163 = vmatmul.f32.gmra.mxu0 %v126
    %v164 = vpop.f32.mrf.mxu0
    %v165 = vadd.f32 %v145, %v164
    %166 = vdwg.mxu0
    %v167 = vmax.f32 %v165, 0.0
    %v168 = vld [vmem:[#allocation6] sm:$0xff]
    %v169 = vld [vmem:[#allocation6 + $0x8] sm:$0xff]
    %v170 = vld [vmem:[#allocation6 + $0x10] sm:$0xff]
    %v171 = vld [vmem:[#allocation6 + $0x18] sm:$0xff]
    %v172 = vld [vmem:[#allocation6 + $0x20] sm:$0xff]
    %v173 = vld [vmem:[#allocation6 + $0x28] sm:$0xff]
    %v174 = vld [vmem:[#allocation6 + $0x30] sm:$0xff]
    %v175 = vld [vmem:[#allocation6 + $0x38] sm:$0xff]
    %v176 = vld [vmem:[#allocation6 + $0x40] sm:$0xff]
    %v177 = vld [vmem:[#allocation6 + $0x48] sm:$0xff]
    %v178 = vld [vmem:[#allocation6 + $0x50] sm:$0xff]
    %v179 = vld [vmem:[#allocation6 + $0x58] sm:$0xff]
    %v180 = vld [vmem:[#allocation6 + $0x60] sm:$0xff]
    %v181 = vld [vmem:[#allocation6 + $0x68] sm:$0xff]
    %v182 = vld [vmem:[#allocation6 + $0x70] sm:$0xff]
    %v183 = vld [vmem:[#allocation6 + $0x78] sm:$0xff]
    %v184 = vld [vmem:[%s6] sm:$0x1]
    %v186 = vperm.slane %v184, 0
    %188 = vmatpush.msra.mxu0 %v183
    %189 = vmatpush.msra.mxu0 %v182
    %190 = vmatpush.msra.mxu0 %v181
    %191 = vmatpush.msra.mxu0 %v180
    %192 = vmatpush.msra.mxu0 %v179
    %193 = vmatpush.msra.mxu0 %v178
    %194 = vmatpush.msra.mxu0 %v177
    %195 = vmatpush.msra.mxu0 %v176
    %196 = vmatpush.msra.mxu0 %v175
    %197 = vmatpush.msra.mxu0 %v174
    %198 = vmatpush.msra.mxu0 %v173
    %199 = vmatpush.msra.mxu0 %v172
    %200 = vmatpush.msra.mxu0 %v171
    %201 = vmatpush.msra.mxu0 %v170
    %202 = vmatpush.msra.mxu0 %v169
    %203 = vmatpush.msra.mxu0 %v168
    %204 = vmatmul.f32.gmra.mxu0 %v167
    %v205 = vpop.f32.mrf.mxu0
    %v206 = vadd.f32 %v186, %v205
    %207 = vdwg.mxu0
    %208 = vst [vmem:[%s7] sm:$0xff] %v206
    // Predicated region
    $region42: #{cnn_forward.1} parent=1 // pred_check
      _
    $region43: #{cnn_forward.1} parent=1 // pred_check_branch
      %210 = sbr.rel (0) target = $region45
    $region44: #{cnn_forward.1} parent=1 // pred_region
      _
    $region45: #{cnn_forward.1} parent=1 // pred_fallthru
      _
    // Predicated region
    $region46: #{cnn_forward.1} parent=1 // pred_check
      _
    $region47: #{cnn_forward.1} parent=1 // pred_check_branch
      %212 = sbr.rel (0) target = $region49
    $region48: #{cnn_forward.1} parent=1 // pred_region
      _
    $region49: #{cnn_forward.1} parent=1 // pred_fallthru
      _
    %213 = vsyncpa [#allocation3], 1
    %214 = vsyncpa [#allocation5], 1

</llo_original>
